<compile_context>
chip_gen: v7x
topology: tpu7x:2x2x1
jax: 0.10.0
libtpu: 0.0.40
codegen_flags: <defaults>
</compile_context>

<pallas_src>
import jax
import jax.numpy as jnp
from jax.experimental import pallas as pl
from jax.experimental.pallas import tpu as pltpu

# ---------------- config (mirrors the PyTorch config dict) ------------------
CONFIG = {
    "model": {
        "state_dim": 12,
        "control_dim": 4,
        "accel_dim": 8,
        "hidden_layers": [32, 32],
        "activation": "relu",
        "dropout": 0.0,
    }
}
BN_EPS = 1e-5

_M = CONFIG["model"]
SD, CD = _M["state_dim"], _M["control_dim"]
H1, H2 = _M["hidden_layers"]
OUT_DIM = _M["accel_dim"]
AUX_W = max(H1, H2, OUT_DIM)


# --------------------- hardware-aware sizing helpers ------------------------
def _round_up(x, m):
    return ((x + m - 1) // m) * m


def _vmem_limit_bytes():
    """Generation-aware scoped-VMEM budget (v7x has only 64 MiB physical)."""
    cap = None
    try:
        cap = getattr(pltpu.get_tpu_info(), "vmem_capacity_bytes", None)
    except Exception:
        cap = None
    if not cap:
        cap = 64 * 1024 * 1024          # conservative: v7x physical per-core
    return int(max(16 * 1024 * 1024, min(int(cap * 0.70), 96 * 1024 * 1024)))


def _auto_tile_rows(vmem_bytes, per_row_bytes=8 * 1024):
    """Rows per grid step.  Narrow (<128) f32 operands pad to 128 lanes, so a
    row costs ~512 B per live operand; 8 KiB/row covers double-buffered inputs,
    the output and all intermediates with margin."""
    t = (vmem_bytes // per_row_bytes // 512) * 512
    return int(max(512, min(8192, t)))


def _cost(flops, bytes_accessed, transcendentals=0):
    return pl.CostEstimate(flops=int(flops), transcendentals=int(transcendentals),
                           bytes_accessed=int(bytes_accessed))


def _mlp_flops(n):
    return 2 * n * ((SD + max(CD, 1)) * H1 + H1 * H2 + H2 * OUT_DIM)


def _mlp_bytes(n):
    return 4 * (n * (SD + max(CD, 1) + OUT_DIM)
                + (SD + max(CD, 1)) * H1 + H1 * H2 + H2 * OUT_DIM + 5 * AUX_W)


def _pack_rows(vecs, width):
    """Pack (1, d<=width) f32 vectors into one (len(vecs), width) array."""
    rows = []
    for v in vecs:
        v = jnp.asarray(v, jnp.float32).reshape(1, -1)
        pad = width - v.shape[1]
        rows.append(jnp.pad(v, ((0, 0), (0, pad))) if pad else v)
    return jnp.concatenate(rows, axis=0)


def _split_w1(state, control, w1):
    """Split W1 so the input concat is folded into two matmuls."""
    if CD == 0:
        control = jnp.zeros((state.shape[0], 1), state.dtype)
        return control, w1, jnp.zeros((1, w1.shape[1]), w1.dtype)
    return control, w1[:SD], w1[SD:]


def _const_spec(arr):
    return pl.BlockSpec(arr.shape, lambda i: (0, 0))


# --------------------------- kernels -----------------------------------------
def _mlp_apply_kernel(s_ref, c_ref, w1s_ref, w1c_ref, w2_ref, w3_ref, aux_ref,
                      o_ref):
    """Shared batch-parallel apply pass: per-layer (scale, shift) already folded
    (eval running stats OR training batch stats) into aux rows
    [scale1, shift1, scale2, shift2, b3]."""
    aux = aux_ref[...]
    scale1, shift1 = aux[0:1, :H1], aux[1:2, :H1]
    scale2, shift2 = aux[2:3, :H2], aux[3:4, :H2]
    b3 = aux[4:5, :OUT_DIM]

    z1 = (jnp.dot(s_ref[...], w1s_ref[...], preferred_element_type=jnp.float32)
          + jnp.dot(c_ref[...], w1c_ref[...], preferred_element_type=jnp.float32))
    h1 = jnp.maximum(z1 * scale1 + shift1, 0.0)
    z2 = jnp.dot(h1, w2_ref[...], preferred_element_type=jnp.float32)
    h2 = jnp.maximum(z2 * scale2 + shift2, 0.0)
    out = jnp.dot(h2, w3_ref[...], preferred_element_type=jnp.float32) + b3
    # TODO(synk): lane-dense (tile,8)->(tile/16,128) store slab (needs a
    # cross-lane relayout reshape in Mosaic); HBM bytes are already minimal.
    o_ref[...] = out.astype(o_ref.dtype)


def _train_fused_kernel(s_ref, c_ref, w1s_ref, w1c_ref, w2_ref, w3_ref, aux_ref,
                        o_ref):
    """Whole-batch training-mode kernel (batch-statistics BN), for small N.
    Hidden Linear biases omitted: BN mean-subtraction cancels them exactly."""
    aux = aux_ref[...]
    g1, be1 = aux[0:1, :H1], aux[1:2, :H1]
    g2, be2 = aux[2:3, :H2], aux[3:4, :H2]
    b3 = aux[4:5, :OUT_DIM]

    def bn_relu(z, g, be):
        mean = jnp.mean(z, axis=0, keepdims=True)
        diff = z - mean
        var = jnp.mean(diff * diff, axis=0, keepdims=True)
        scale = g * jax.lax.rsqrt(var + BN_EPS)       # (1, F), EUP rsqrt
        shift = be - mean * scale
        return jnp.maximum(z * scale + shift, 0.0)

    z1 = (jnp.dot(s_ref[...], w1s_ref[...], preferred_element_type=jnp.float32)
          + jnp.dot(c_ref[...], w1c_ref[...], preferred_element_type=jnp.float32))
    h1 = bn_relu(z1, g1, be1)
    h2 = bn_relu(jnp.dot(h1, w2_ref[...], preferred_element_type=jnp.float32),
                 g2, be2)
    out = jnp.dot(h2, w3_ref[...], preferred_element_type=jnp.float32) + b3
    o_ref[...] = out.astype(o_ref.dtype)


def _make_stats1_kernel(n_rows, tile_rows):
    """Pass 1: accumulate per-feature sum / sum-of-squares of z1 over batch."""
    def kernel(s_ref, c_ref, w1s_ref, w1c_ref, sum_ref, sq_ref):
        @pl.when(pl.program_id(0) == 0)
        def _():
            sum_ref[...] = jnp.zeros_like(sum_ref)
            sq_ref[...] = jnp.zeros_like(sq_ref)

        z1 = (jnp.dot(s_ref[...], w1s_ref[...], preferred_element_type=jnp.float32)
              + jnp.dot(c_ref[...], w1c_ref[...], preferred_element_type=jnp.float32))
        row = (pl.program_id(0) * tile_rows
               + jax.lax.broadcasted_iota(jnp.int32, (tile_rows, 1), 0))
        z1 = jnp.where(row < n_rows, z1, 0.0)        # mask padded rows
        sum_ref[...] += jnp.sum(z1, axis=0, keepdims=True)
        sq_ref[...] += jnp.sum(z1 * z1, axis=0, keepdims=True)
    return kernel


def _make_stats2_kernel(n_rows, tile_rows):
    """Pass 2: recompute h1 with folded BN1, accumulate z2 sum / sum-of-sq."""
    def kernel(s_ref, c_ref, w1s_ref, w1c_ref, fold1_ref, w2_ref, sum_ref, sq_ref):
        @pl.when(pl.program_id(0) == 0)
        def _():
            sum_ref[...] = jnp.zeros_like(sum_ref)
            sq_ref[...] = jnp.zeros_like(sq_ref)

        fold1 = fold1_ref[...]
        scale1, shift1 = fold1[0:1, :], fold1[1:2, :]
        z1 = (jnp.dot(s_ref[...], w1s_ref[...], preferred_element_type=jnp.float32)
              + jnp.dot(c_ref[...], w1c_ref[...], preferred_element_type=jnp.float32))
        h1 = jnp.maximum(z1 * scale1 + shift1, 0.0)
        row = (pl.program_id(0) * tile_rows
               + jax.lax.broadcasted_iota(jnp.int32, (tile_rows, 1), 0))
        h1 = jnp.where(row < n_rows, h1, 0.0)        # mask padded rows
        z2 = jnp.dot(h1, w2_ref[...], preferred_element_type=jnp.float32)
        sum_ref[...] += jnp.sum(z2, axis=0, keepdims=True)
        sq_ref[...] += jnp.sum(z2 * z2, axis=0, keepdims=True)
    return kernel


# --------------------------- wrappers -----------------------------------------
def _mlp_apply(state, control, w1s, w1c, w2, w3, aux, *, tile_n, vmem_bytes):
    """Batch-tiled (grid over N) application of the folded MLP; rows are
    independent, so the grid axis is 'parallel' (v7x two-core split) and
    ragged N is handled by zero-padding + output slice."""
    n = state.shape[0]
    sd, cd = state.shape[1], control.shape[1]
    if tile_n is None:
        tile_n = _auto_tile_rows(vmem_bytes)
    tile_n = _round_up(max(8, min(tile_n, _round_up(n, 8))), 8)
    n_pad = _round_up(n, tile_n)
    if n_pad != n:
        state = jnp.pad(state, ((0, n_pad - n), (0, 0)))
        control = jnp.pad(control, ((0, n_pad - n), (0, 0)))

    out = pl.pallas_call(
        _mlp_apply_kernel,
        out_shape=jax.ShapeDtypeStruct((n_pad, OUT_DIM), jnp.float32),
        grid=(n_pad // tile_n,),
        in_specs=[
            pl.BlockSpec((tile_n, sd), lambda i: (i, 0)),
            pl.BlockSpec((tile_n, cd), lambda i: (i, 0)),
            _const_spec(w1s), _const_spec(w1c),
            _const_spec(w2), _const_spec(w3), _const_spec(aux),
        ],
        out_specs=pl.BlockSpec((tile_n, OUT_DIM), lambda i: (i, 0)),
        compiler_params=pltpu.CompilerParams(
            dimension_semantics=("parallel",),
            vmem_limit_bytes=vmem_bytes),
        cost_estimate=_cost(_mlp_flops(n_pad), _mlp_bytes(n_pad)),
    )(state, control, w1s, w1c, w2, w3, aux)
    return out[:n] if n_pad != n else out


def _train_fused(state, control, params, vmem_bytes):
    """Small-batch training forward: one whole-batch block, one launch."""
    n = state.shape[0]
    control, w1s, w1c = _split_w1(state, control, params["w1"])
    aux = _pack_rows([params["g1"], params["be1"], params["g2"], params["be2"],
                      params["b3"]], AUX_W)
    vspec = pl.BlockSpec(memory_space=pltpu.MemorySpace.VMEM)
    inputs = [state, control, w1s, w1c, params["w2"], params["w3"], aux]
    return pl.pallas_call(
        _train_fused_kernel,
        out_shape=jax.ShapeDtypeStruct((n, OUT_DIM), jnp.float32),
        in_specs=[vspec] * len(inputs),
        out_specs=vspec,
        compiler_params=pltpu.CompilerParams(vmem_limit_bytes=vmem_bytes),
        cost_estimate=_cost(_mlp_flops(n), _mlp_bytes(n),
                            transcendentals=2 * (H1 + H2)),
    )(*inputs)


def _train_tiled(state, control, params, tile_n, vmem_bytes):
    """Large-batch training forward: 3 tiled grid passes (stats1 / stats2 /
    apply).  Padded rows are masked out of the batch statistics."""
    n = state.shape[0]
    control, w1s, w1c = _split_w1(state, control, params["w1"])
    w2, w3 = params["w2"], params["w3"]

    if tile_n is None:
        tile_n = _auto_tile_rows(vmem_bytes)
    tile_n = _round_up(max(8, min(tile_n, _round_up(n, 8))), 8)
    n_pad = _round_up(n, tile_n)
    sp = jnp.pad(state, ((0, n_pad - n), (0, 0))) if n_pad != n else state
    cp = jnp.pad(control, ((0, n_pad - n), (0, 0))) if n_pad != n else control
    grid = (n_pad // tile_n,)
    sd, cd = sp.shape[1], cp.shape[1]
    row_spec = lambda w: pl.BlockSpec((tile_n, w), lambda i: (i, 0))
    stat_spec = lambda h: pl.BlockSpec((1, h), lambda i: (0, 0))
    arb = pltpu.CompilerParams(dimension_semantics=("arbitrary",),
                               vmem_limit_bytes=vmem_bytes)

    # ---- pass 1: layer-1 batch stats ----
    sum1, sq1 = pl.pallas_call(
        _make_stats1_kernel(n, tile_n),
        out_shape=(jax.ShapeDtypeStruct((1, H1), jnp.float32),
                   jax.ShapeDtypeStruct((1, H1), jnp.float32)),
        grid=grid,
        in_specs=[row_spec(sd), row_spec(cd), _const_spec(w1s), _const_spec(w1c)],
        out_specs=(stat_spec(H1), stat_spec(H1)),
        compiler_params=arb,
        cost_estimate=_cost(2 * n_pad * (sd + cd) * H1 + 3 * n_pad * H1,
                            4 * (n_pad * (sd + cd) + (sd + cd) * H1 + 2 * H1)),
    )(sp, cp, w1s, w1c)
    mean1 = sum1 / n
    var1 = jnp.maximum(sq1 / n - mean1 * mean1, 0.0)     # biased variance
    scale1 = params["g1"] * jax.lax.rsqrt(var1 + BN_EPS)
    shift1 = params["be1"] - mean1 * scale1
    fold1 = jnp.concatenate([scale1, shift1], axis=0)    # (2, H1)

    # ---- pass 2: layer-2 batch stats ----
    sum2, sq2 = pl.pallas_call(
        _make_stats2_kernel(n, tile_n),
        out_shape=(jax.ShapeDtypeStruct((1, H2), jnp.float32),
                   jax.ShapeDtypeStruct((1, H2), jnp.float32)),
        grid=grid,
        in_specs=[row_spec(sd), row_spec(cd), _const_spec(w1s), _const_spec(w1c),
                  _const_spec(fold1), _const_spec(w2)],
        out_specs=(stat_spec(H2), stat_spec(H2)),
        compiler_params=arb,
        cost_estimate=_cost(2 * n_pad * ((sd + cd) * H1 + H1 * H2) + 6 * n_pad * H1,
                            4 * (n_pad * (sd + cd) + (sd + cd) * H1 + H1 * H2
                                 + 2 * H1 + 2 * H2)),
    )(sp, cp, w1s, w1c, fold1, w2)
    mean2 = sum2 / n
    var2 = jnp.maximum(sq2 / n - mean2 * mean2, 0.0)
    scale2 = params["g2"] * jax.lax.rsqrt(var2 + BN_EPS)
    shift2 = params["be2"] - mean2 * scale2

    # ---- pass 3: batch-parallel apply (shared with eval) ----
    aux = _pack_rows([scale1, shift1, scale2, shift2, params["b3"]], AUX_W)
    return _mlp_apply(state, control, w1s, w1c, w2, w3, aux,
                      tile_n=tile_n, vmem_bytes=vmem_bytes)


def dynamics_net_forward_train(state, control, params, *, tile_n=None,
                               force_tiled=False):
    """Training-mode forward (BatchNorm uses batch statistics).
    state: (N, state_dim), control: (N, control_dim) -> (N, accel_dim)."""
    vmem = _vmem_limit_bytes()
    fused_max = min(4096, _auto_tile_rows(vmem))
    if force_tiled or state.shape[0] > fused_max:
        return _train_tiled(state, control, params, tile_n, vmem)
    return _train_fused(state, control, params, vmem)


def dynamics_net_forward_eval(state, control, params, *, tile_n=None):
    """Eval-mode forward: running-stats BN folded into per-feature scale/shift
    at trace time; batch-tiled grid with padding for ragged N."""
    vmem = _vmem_limit_bytes()
    control, w1s, w1c = _split_w1(state, control, params["w1"])

    def fold(b, g, be, rm, rv):
        scale = g * jax.lax.rsqrt(rv + BN_EPS)
        shift = (b - rm) * scale + be
        return scale, shift

    scale1, shift1 = fold(params["b1"], params["g1"], params["be1"],
                          params["rm1"], params["rv1"])
    scale2, shift2 = fold(params["b2"], params["g2"], params["be2"],
                          params["rm2"], params["rv2"])
    aux = _pack_rows([scale1, shift1, scale2, shift2, params["b3"]], AUX_W)
    return _mlp_apply(state, control, w1s, w1c, params["w2"], params["w3"], aux,
                      tile_n=tile_n, vmem_bytes=vmem)


# -------------------------- deterministic params ------------------------------
def init_params(key):
    in_size = SD + CD
    ks = jax.random.split(key, 14)

    def linear(kw, kb, din, dout):
        # PyTorch nn.Linear default init: U(-1/sqrt(fan_in), 1/sqrt(fan_in)).
        bound = 1.0 / (din ** 0.5)
        w = jax.random.uniform(kw, (din, dout), jnp.float32, -bound, bound)
        b = jax.random.uniform(kb, (1, dout), jnp.float32, -bound, bound)
        return w, b

    w1, b1 = linear(ks[0], ks[1], in_size, H1)
    w2, b2 = linear(ks[2], ks[3], H1, H2)
    w3, b3 = linear(ks[4], ks[5], H2, OUT_DIM)
    return {
        "w1": w1, "b1": b1,
        "g1": 1.0 + 0.1 * jax.random.normal(ks[6], (1, H1), jnp.float32),
        "be1": 0.1 * jax.random.normal(ks[7], (1, H1), jnp.float32),
        "rm1": 0.1 * jax.random.normal(ks[8], (1, H1), jnp.float32),
        "rv1": jax.random.uniform(ks[9], (1, H1), jnp.float32, 0.5, 1.5),
        "w2": w2, "b2": b2,
        "g2": 1.0 + 0.1 * jax.random.normal(ks[10], (1, H2), jnp.float32),
        "be2": 0.1 * jax.random.normal(ks[11], (1, H2), jnp.float32),
        "rm2": 0.1 * jax.random.normal(ks[12], (1, H2), jnp.float32),
        "rv2": jax.random.uniform(ks[13], (1, H2), jnp.float32, 0.5, 1.5),
        "w3": w3, "b3": b3,
    }


# ------------------------------- references -----------------------------------
def reference_train(state, control, p):
    x = jnp.concatenate([state, control], axis=-1)

    def layer(h, w, b, g, be):
        z = h @ w + b                              # bias kept here on purpose
        mean = jnp.mean(z, axis=0, keepdims=True)
        var = jnp.mean((z - mean) ** 2, axis=0, keepdims=True)
        zn = (z - mean) / jnp.sqrt(var + BN_EPS) * g + be
        return jnp.maximum(zn, 0.0)

    h = layer(x, p["w1"], p["b1"], p["g1"], p["be1"])
    h = layer(h, p["w2"], p["b2"], p["g2"], p["be2"])
    return h @ p["w3"] + p["b3"]


def reference_eval(state, control, p):
    x = jnp.concatenate([state, control], axis=-1)

    def layer(h, w, b, g, be, rm, rv):
        z = h @ w + b
        zn = (z - rm) / jnp.sqrt(rv + BN_EPS) * g + be
        return jnp.maximum(zn, 0.0)

    h = layer(x, p["w1"], p["b1"], p["g1"], p["be1"], p["rm1"], p["rv1"])
    h = layer(h, p["w2"], p["b2"], p["g2"], p["be2"], p["rm2"], p["rv2"])
    return h @ p["w3"] + p["b3"]


# --------------------------------- main ---------------------------------------
if __name__ == "__main__":
    key = jax.random.PRNGKey(0)
    k_state, k_ctrl, k_param, k_state2, k_ctrl2 = jax.random.split(key, 5)

    batch = 64
    state = jax.random.normal(k_state, (batch, SD), jnp.float32)
    control = jax.random.normal(k_ctrl, (batch, CD), jnp.float32)
    params = init_params(k_param)

    # 1) training-mode, fused whole-batch kernel (small-batch latency path)
    out_tr = jax.block_until_ready(dynamics_net_forward_train(state, control, params))
    ref_tr = reference_train(state, control, params)
    assert out_tr.shape == (batch, OUT_DIM)
    assert jnp.allclose(out_tr, ref_tr, atol=1e-4, rtol=1e-4), "fused train mismatch"

    # 2) training-mode, tiled 3-pass path (ragged N exercises padding + masking)
    batch2 = 200
    state2 = jax.random.normal(k_state2, (batch2, SD), jnp.float32)
    control2 = jax.random.normal(k_ctrl2, (batch2, CD), jnp.float32)
    out_tr2 = jax.block_until_ready(
        dynamics_net_forward_train(state2, control2, params,
                                   force_tiled=True, tile_n=64))
    ref_tr2 = reference_train(state2, control2, params)
    assert out_tr2.shape == (batch2, OUT_DIM)
    assert jnp.allclose(out_tr2, ref_tr2, atol=1e-4, rtol=1e-4), "tiled train mismatch"

    # 3) eval-mode (running-stats BN), batch-tiled grid of 2 steps
    out_ev = jax.block_until_ready(
        dynamics_net_forward_eval(state, control, params, tile_n=32))
    ref_ev = reference_eval(state, control, params)
    assert out_ev.shape == (batch, OUT_DIM)
    assert jnp.allclose(out_ev, ref_ev, atol=1e-4, rtol=1e-4), "eval mismatch"

    # 4) eval-mode, ragged batch (padding + output slice path)
    out_ev2 = jax.block_until_ready(
        dynamics_net_forward_eval(state2[:50], control2[:50], params, tile_n=32))
    ref_ev2 = reference_eval(state2[:50], control2[:50], params)
    assert out_ev2.shape == (50, OUT_DIM)
    assert jnp.allclose(out_ev2, ref_ev2, atol=1e-4, rtol=1e-4), "ragged eval mismatch"

    print("KERNEL_OK")
</pallas_src>

<mosaic_0001>
module attributes {stable_mosaic.version = 11 : i64} {
  func.func @_train_fused_kernel(%arg0: memref<64x12xf32, #tpu.memory_space<vmem>>, %arg1: memref<64x4xf32, #tpu.memory_space<vmem>>, %arg2: memref<12x32xf32, #tpu.memory_space<vmem>>, %arg3: memref<4x32xf32, #tpu.memory_space<vmem>>, %arg4: memref<32x32xf32, #tpu.memory_space<vmem>>, %arg5: memref<32x8xf32, #tpu.memory_space<vmem>>, %arg6: memref<5x32xf32, #tpu.memory_space<vmem>>, %arg7: memref<64x8xf32, #tpu.memory_space<vmem>>) attributes {dimension_semantics = [], scalar_prefetch = 0 : i64, scratch_operands = 0 : i64, tpu.core_type = #tpu.core_type<tc>} {
    %c0 = arith.constant 0 : index
    %c0_0 = arith.constant 0 : index
    %0 = vector.load %arg6[%c0, %c0_0] : memref<5x32xf32, #tpu.memory_space<vmem>>, vector<5x32xf32>
    %1 = vector.extract_strided_slice %0 {offsets = [0, 0], sizes = [1, 32], strides = [1, 1]} : vector<5x32xf32> to vector<1x32xf32>
    %2 = vector.extract_strided_slice %0 {offsets = [1, 0], sizes = [1, 32], strides = [1, 1]} : vector<5x32xf32> to vector<1x32xf32>
    %3 = vector.extract_strided_slice %0 {offsets = [2, 0], sizes = [1, 32], strides = [1, 1]} : vector<5x32xf32> to vector<1x32xf32>
    %4 = vector.extract_strided_slice %0 {offsets = [3, 0], sizes = [1, 32], strides = [1, 1]} : vector<5x32xf32> to vector<1x32xf32>
    %5 = vector.extract_strided_slice %0 {offsets = [4, 0], sizes = [1, 8], strides = [1, 1]} : vector<5x32xf32> to vector<1x8xf32>
    %c0_1 = arith.constant 0 : index
    %c0_2 = arith.constant 0 : index
    %6 = vector.load %arg0[%c0_1, %c0_2] : memref<64x12xf32, #tpu.memory_space<vmem>>, vector<64x12xf32>
    %c0_3 = arith.constant 0 : index
    %c0_4 = arith.constant 0 : index
    %7 = vector.load %arg2[%c0_3, %c0_4] : memref<12x32xf32, #tpu.memory_space<vmem>>, vector<12x32xf32>
    %cst = arith.constant dense<0.000000e+00> : vector<64x32xf32>
    %8 = tpu.matmul %6, %7, %cst {dimension_numbers = #tpu.dot_dimension_numbers<[1], [0], [0], [1], [0, 0, 1, 1], [], []>} : vector<64x12xf32>, vector<12x32xf32>, vector<64x32xf32> -> vector<64x32xf32>
    %c0_5 = arith.constant 0 : index
    %c0_6 = arith.constant 0 : index
    %9 = vector.load %arg1[%c0_5, %c0_6] : memref<64x4xf32, #tpu.memory_space<vmem>>, vector<64x4xf32>
    %c0_7 = arith.constant 0 : index
    %c0_8 = arith.constant 0 : index
    %10 = vector.load %arg3[%c0_7, %c0_8] : memref<4x32xf32, #tpu.memory_space<vmem>>, vector<4x32xf32>
    %cst_9 = arith.constant dense<0.000000e+00> : vector<64x32xf32>
    %11 = tpu.matmul %9, %10, %cst_9 {dimension_numbers = #tpu.dot_dimension_numbers<[1], [0], [0], [1], [0, 0, 1, 1], [], []>} : vector<64x4xf32>, vector<4x32xf32>, vector<64x32xf32> -> vector<64x32xf32>
    %12 = arith.addf %8, %11 : vector<64x32xf32>
    %cst_10 = arith.constant dense<0.000000e+00> : vector<32xf32>
    %13 = vector.multi_reduction <add>, %12, %cst_10 [0] : vector<64x32xf32> to vector<32xf32>
    %14 = vector.shape_cast %13 : vector<32xf32> to vector<1x32xf32>
    %cst_11 = arith.constant 6.400000e+01 : f32
    %15 = vector.broadcast %cst_11 : f32 to vector<1x32xf32>
    %16 = arith.divf %14, %15 : vector<1x32xf32>
    %17 = vector.broadcast %16 : vector<1x32xf32> to vector<64x32xf32>
    %18 = arith.subf %12, %17 : vector<64x32xf32>
    %19 = arith.mulf %18, %18 : vector<64x32xf32>
    %cst_12 = arith.constant dense<0.000000e+00> : vector<32xf32>
    %20 = vector.multi_reduction <add>, %19, %cst_12 [0] : vector<64x32xf32> to vector<32xf32>
    %21 = vector.shape_cast %20 : vector<32xf32> to vector<1x32xf32>
    %cst_13 = arith.constant 6.400000e+01 : f32
    %22 = vector.broadcast %cst_13 : f32 to vector<1x32xf32>
    %23 = arith.divf %21, %22 : vector<1x32xf32>
    %cst_14 = arith.constant 9.99999974E-6 : f32
    %24 = vector.broadcast %cst_14 : f32 to vector<1x32xf32>
    %25 = arith.addf %23, %24 : vector<1x32xf32>
    %26 = math.rsqrt %25 : vector<1x32xf32>
    %27 = arith.mulf %1, %26 : vector<1x32xf32>
    %28 = arith.mulf %16, %27 : vector<1x32xf32>
    %29 = arith.subf %2, %28 : vector<1x32xf32>
    %30 = vector.broadcast %27 : vector<1x32xf32> to vector<64x32xf32>
    %31 = arith.mulf %12, %30 : vector<64x32xf32>
    %32 = vector.broadcast %29 : vector<1x32xf32> to vector<64x32xf32>
    %33 = arith.addf %31, %32 : vector<64x32xf32>
    %cst_15 = arith.constant 0.000000e+00 : f32
    %34 = vector.broadcast %cst_15 : f32 to vector<64x32xf32>
    %35 = arith.maximumf %33, %34 : vector<64x32xf32>
    %c0_16 = arith.constant 0 : index
    %c0_17 = arith.constant 0 : index
    %36 = vector.load %arg4[%c0_16, %c0_17] : memref<32x32xf32, #tpu.memory_space<vmem>>, vector<32x32xf32>
    %cst_18 = arith.constant dense<0.000000e+00> : vector<64x32xf32>
    %37 = tpu.matmul %35, %36, %cst_18 {dimension_numbers = #tpu.dot_dimension_numbers<[1], [0], [0], [1], [0, 0, 1, 1], [], []>} : vector<64x32xf32>, vector<32x32xf32>, vector<64x32xf32> -> vector<64x32xf32>
    %cst_19 = arith.constant dense<0.000000e+00> : vector<32xf32>
    %38 = vector.multi_reduction <add>, %37, %cst_19 [0] : vector<64x32xf32> to vector<32xf32>
    %39 = vector.shape_cast %38 : vector<32xf32> to vector<1x32xf32>
    %cst_20 = arith.constant 6.400000e+01 : f32
    %40 = vector.broadcast %cst_20 : f32 to vector<1x32xf32>
    %41 = arith.divf %39, %40 : vector<1x32xf32>
    %42 = vector.broadcast %41 : vector<1x32xf32> to vector<64x32xf32>
    %43 = arith.subf %37, %42 : vector<64x32xf32>
    %44 = arith.mulf %43, %43 : vector<64x32xf32>
    %cst_21 = arith.constant dense<0.000000e+00> : vector<32xf32>
    %45 = vector.multi_reduction <add>, %44, %cst_21 [0] : vector<64x32xf32> to vector<32xf32>
    %46 = vector.shape_cast %45 : vector<32xf32> to vector<1x32xf32>
    %cst_22 = arith.constant 6.400000e+01 : f32
    %47 = vector.broadcast %cst_22 : f32 to vector<1x32xf32>
    %48 = arith.divf %46, %47 : vector<1x32xf32>
    %cst_23 = arith.constant 9.99999974E-6 : f32
    %49 = vector.broadcast %cst_23 : f32 to vector<1x32xf32>
    %50 = arith.addf %48, %49 : vector<1x32xf32>
    %51 = math.rsqrt %50 : vector<1x32xf32>
    %52 = arith.mulf %3, %51 : vector<1x32xf32>
    %53 = arith.mulf %41, %52 : vector<1x32xf32>
    %54 = arith.subf %4, %53 : vector<1x32xf32>
    %55 = vector.broadcast %52 : vector<1x32xf32> to vector<64x32xf32>
    %56 = arith.mulf %37, %55 : vector<64x32xf32>
    %57 = vector.broadcast %54 : vector<1x32xf32> to vector<64x32xf32>
    %58 = arith.addf %56, %57 : vector<64x32xf32>
    %cst_24 = arith.constant 0.000000e+00 : f32
    %59 = vector.broadcast %cst_24 : f32 to vector<64x32xf32>
    %60 = arith.maximumf %58, %59 : vector<64x32xf32>
    %c0_25 = arith.constant 0 : index
    %c0_26 = arith.constant 0 : index
    %61 = vector.load %arg5[%c0_25, %c0_26] : memref<32x8xf32, #tpu.memory_space<vmem>>, vector<32x8xf32>
    %cst_27 = arith.constant dense<0.000000e+00> : vector<64x8xf32>
    %62 = tpu.matmul %60, %61, %cst_27 {dimension_numbers = #tpu.dot_dimension_numbers<[1], [0], [0], [1], [0, 0, 1, 1], [], []>} : vector<64x32xf32>, vector<32x8xf32>, vector<64x8xf32> -> vector<64x8xf32>
    %63 = vector.broadcast %5 : vector<1x8xf32> to vector<64x8xf32>
    %64 = arith.addf %62, %63 : vector<64x8xf32>
    %c0_28 = arith.constant 0 : index
    %c0_29 = arith.constant 0 : index
    %65 = vector.load %arg7[%c0_28, %c0_29] : memref<64x8xf32, #tpu.memory_space<vmem>>, vector<64x8xf32>
    tpu.vector_store %arg7[%c0_28, %c0_29], %64 {strides = array<i32>} : memref<64x8xf32, #tpu.memory_space<vmem>>, vector<64x8xf32>,
    return
  }
}

</mosaic_0001>

<llo_original>
// kernel: tpu_custom_call.1
$region0: #{tpu_custom_call.1}
  #allocation0 [shape = 'u32[]', space=smem, size = 0x4, offset = 0x4, fixed_abs, tag = 'smem constant byte address 0x4 - core index']
  #allocation1 [shape = 'u32[144,128]{1,0:T(1,128)}', space=vmem, size = 0x12000, scoped, tag = 'internal scratch']
  %s0 = inlined_call_operand.vmem [shape: f32[64,12], index: 0, kind: input, shape index: {}]
  %s1 = inlined_call_operand.vmem [shape: f32[64,4], index: 1, kind: input, shape index: {}]
  %s2 = inlined_call_operand.vmem [shape: f32[12,32], index: 2, kind: input, shape index: {}]
  %s3 = inlined_call_operand.vmem [shape: f32[4,32], index: 3, kind: input, shape index: {}]
  %s4 = inlined_call_operand.vmem [shape: f32[32,32], index: 4, kind: input, shape index: {}]
  %s5 = inlined_call_operand.vmem [shape: f32[32,8], index: 5, kind: input, shape index: {}]
  %s6 = inlined_call_operand.vmem [shape: f32[5,32], index: 6, kind: input, shape index: {}]
  %s7 = inlined_call_operand.vmem [shape: f32[64,8], index: 7, kind: output, shape index: {}]
  %s8 = sld [smem:[#allocation0]]
  $region38: #{tpu_custom_call.1} parent=0
    _
  %s10 = ssub.s32 1, %s8
  %s11 = scalar_select 0, %s10, %s8
  // Predicated region
  $region2: #{tpu_custom_call.1} parent=0 // pred_check
    _
  $region3: #{tpu_custom_call.1} parent=0 // pred_check_branch
    %13 = sbr.rel (0) target = $region5
  $region4: #{tpu_custom_call.1} parent=0 // pred_region
    _
  $region5: #{tpu_custom_call.1} parent=0 // pred_fallthru
    _
  // Predicated region
  $region6: #{tpu_custom_call.1} parent=0 // pred_check
    _
  $region7: #{tpu_custom_call.1} parent=0 // pred_check_branch
    %15 = sbr.rel (0) target = $region9
  $region8: #{tpu_custom_call.1} parent=0 // pred_region
    _
  $region9: #{tpu_custom_call.1} parent=0 // pred_fallthru
    _
  // Predicated region
  $region10: #{tpu_custom_call.1} parent=0 // pred_check
    _
  $region11: #{tpu_custom_call.1} parent=0 // pred_check_branch
    %17 = sbr.rel (0) target = $region13
  $region12: #{tpu_custom_call.1} parent=0 // pred_region
    _
  $region13: #{tpu_custom_call.1} parent=0 // pred_fallthru
    _
  // Predicated region
  $region14: #{tpu_custom_call.1} parent=0 // pred_check
    _
  $region15: #{tpu_custom_call.1} parent=0 // pred_check_branch
    %19 = sbr.rel (0) target = $region17
  $region16: #{tpu_custom_call.1} parent=0 // pred_region
    _
  $region17: #{tpu_custom_call.1} parent=0 // pred_fallthru
    _
  // Predicated region
  $region18: #{tpu_custom_call.1} parent=0 // pred_check
    _
  $region19: #{tpu_custom_call.1} parent=0 // pred_check_branch
    %21 = sbr.rel (0) target = $region21
  $region20: #{tpu_custom_call.1} parent=0 // pred_region
    _
  $region21: #{tpu_custom_call.1} parent=0 // pred_fallthru
    _
  // Predicated region
  $region22: #{tpu_custom_call.1} parent=0 // pred_check
    _
  $region23: #{tpu_custom_call.1} parent=0 // pred_check_branch
    %23 = sbr.rel (0) target = $region25
  $region24: #{tpu_custom_call.1} parent=0 // pred_region
    _
  $region25: #{tpu_custom_call.1} parent=0 // pred_fallthru
    _
  // Predicated region
  $region26: #{tpu_custom_call.1} parent=0 // pred_check
    _
  $region27: #{tpu_custom_call.1} parent=0 // pred_check_branch
    %25 = sbr.rel (0) target = $region29
  $region28: #{tpu_custom_call.1} parent=0 // pred_region
    _
  $region29: #{tpu_custom_call.1} parent=0 // pred_fallthru
    _
  %v26 = vld [vmem:[%s6] sm:$0x1f]
  %v27 = vld [vmem:[%s0] sm:$0xff]
  %v28 = vld [vmem:[%s0 + $0x8] sm:$0xff]
  %v29 = vld [vmem:[%s0 + $0x10] sm:$0xff]
  %v30 = vld [vmem:[%s0 + $0x18] sm:$0xff]
  %v31 = vld [vmem:[%s0 + $0x20] sm:$0xff]
  %v32 = vld [vmem:[%s0 + $0x28] sm:$0xff]
  %v33 = vld [vmem:[%s0 + $0x30] sm:$0xff]
  %v34 = vld [vmem:[%s0 + $0x38] sm:$0xff]
  %v35 = vld [vmem:[%s2] sm:$0xff]
  %v36 = vld [vmem:[%s2 + $0x8] sm:$0xf]
  %v37 = vld [vmem:[%s1] sm:$0xff]
  %v38 = vld [vmem:[%s1 + $0x8] sm:$0xff]
  %v39 = vld [vmem:[%s1 + $0x10] sm:$0xff]
  %v40 = vld [vmem:[%s1 + $0x18] sm:$0xff]
  %v41 = vld [vmem:[%s1 + $0x20] sm:$0xff]
  %v42 = vld [vmem:[%s1 + $0x28] sm:$0xff]
  %v43 = vld [vmem:[%s1 + $0x30] sm:$0xff]
  %v44 = vld [vmem:[%s1 + $0x38] sm:$0xff]
  %v45 = vld [vmem:[%s3] sm:$0xf]
  %vm46 = vcmask 31744
  %v48 = vsel %vm46, %v37, 0
  %v51 = vsel %vm46, %v38, 0
  %v54 = vsel %vm46, %v39, 0
  %v57 = vsel %vm46, %v40, 0
  %v60 = vsel %vm46, %v41, 0
  %v63 = vsel %vm46, %v42, 0
  %v66 = vsel %vm46, %v43, 0
  %v69 = vsel %vm46, %v44, 0
  %vm71 = vcmask 1043456
  %v73 = vsel %vm71, %v45, 0
  %75 = vmatprep.subr.mxu0 0.0
  %76 = vmatpush1.msra.mxu0 %v73
  %77 = vmatprep.subr.mxu0 0.0
  %78 = vmatpush1.msra.mxu0 0.0
  %79 = vmatprep.subr.mxu0 0.0
  %80 = vmatpush1.msra.mxu0 0.0
  %81 = vmatprep.subr.mxu0 0.0
  %82 = vmatpush1.msra.mxu0 0.0
  %83 = vmatprep.subr.mxu0 0.0
  %84 = vmatpush1.msra.mxu0 0.0
  %85 = vmatprep.subr.mxu0 0.0
  %86 = vmatpush1.msra.mxu0 0.0
  %87 = vmatprep.subr.mxu0 0.0
  %88 = vmatpush1.msra.mxu0 0.0
  %89 = vmatprep.subr.mxu0 0.0
  %90 = vmatpush1.msra.mxu0 0.0
  %91 = vmatprep.subr.mxu0 0.0
  %92 = vmatpush1.msra.mxu0 0.0
  %93 = vmatprep.subr.mxu0 0.0
  %94 = vmatpush1.msra.mxu0 0.0
  %95 = vmatprep.subr.mxu0 0.0
  %96 = vmatpush1.msra.mxu0 0.0
  %97 = vmatprep.subr.mxu0 0.0
  %98 = vmatpush1.msra.mxu0 0.0
  %99 = vmatprep.subr.mxu0 0.0
  %100 = vmatpush1.msra.mxu0 0.0
  %101 = vmatprep.subr.mxu0 0.0
  %102 = vmatpush1.msra.mxu0 0.0
  %103 = vmatprep.subr.mxu0 0.0
  %104 = vmatpush1.msra.mxu0 0.0
  %105 = vmatprep.subr.mxu0 0.0
  %106 = vmatpush1.msra.mxu0 0.0
  %107 = vmatprep.subr.mxu0 0.0
  %108 = vmatpush1.msra.mxu0 0.0
  %109 = vmatprep.subr.mxu0 0.0
  %110 = vmatpush1.msra.mxu0 0.0
  %111 = vmatprep.subr.mxu0 0.0
  %112 = vmatpush1.msra.mxu0 0.0
  %113 = vmatprep.subr.mxu0 0.0
  %114 = vmatpush1.msra.mxu0 0.0
  %115 = vmatprep.subr.mxu0 0.0
  %116 = vmatpush1.msra.mxu0 0.0
  %117 = vmatprep.subr.mxu0 0.0
  %118 = vmatpush1.msra.mxu0 0.0
  %119 = vmatprep.subr.mxu0 0.0
  %120 = vmatpush1.msra.mxu0 0.0
  %121 = vmatprep.subr.mxu0 0.0
  %122 = vmatpush1.msra.mxu0 0.0
  %123 = vmatprep.subr.mxu0 0.0
  %124 = vmatpush1.msra.mxu0 0.0
  %125 = vmatprep.subr.mxu0 0.0
  %126 = vmatpush1.msra.mxu0 0.0
  %127 = vmatprep.subr.mxu0 0.0
  %128 = vmatpush1.msra.mxu0 0.0
  %129 = vmatprep.subr.mxu0 0.0
  %130 = vmatpush1.msra.mxu0 0.0
  %131 = vmatprep.subr.mxu0 0.0
  %132 = vmatpush1.msra.mxu0 0.0
  %133 = vmatprep.subr.mxu0 0.0
  %134 = vmatpush1.msra.mxu0 0.0
  %135 = vmatprep.subr.mxu0 0.0
  %136 = vmatpush1.msra.mxu0 0.0
  %137 = vmatprep.subr.mxu0 0.0
  %138 = vmatpush1.msra.mxu0 0.0
  %139 = vmatprep.mubr.f32.mxu0 0.0
  %140 = vmatmul.mubr.f32.gmra.mrb[0].mxu0 %v48
  %v141 = vpop.f32.mrb[0].mxu0
  %v142 = vadd.f32 0.0, %v141
  %v143 = vpop.f32.mrb[0].mxu0
  %144 = vmatprep.mubr.f32.mxu0 0.0
  %145 = vmatmul.mubr.f32.gmra.mrb[0].mxu0 %v51
  %v146 = vpop.f32.mrb[0].mxu0
  %v147 = vadd.f32 0.0, %v146
  %v148 = vpop.f32.mrb[0].mxu0
  %149 = vmatprep.mubr.f32.mxu0 0.0
  %150 = vmatmul.mubr.f32.gmra.mrb[0].mxu0 %v54
  %v151 = vpop.f32.mrb[0].mxu0
  %v152 = vadd.f32 0.0, %v151
  %v153 = vpop.f32.mrb[0].mxu0
  %154 = vmatprep.mubr.f32.mxu0 0.0
  %155 = vmatmul.mubr.f32.gmra.mrb[0].mxu0 %v57
  %v156 = vpop.f32.mrb[0].mxu0
  %v157 = vadd.f32 0.0, %v156
  %v158 = vpop.f32.mrb[0].mxu0
  %159 = vmatprep.mubr.f32.mxu0 0.0
  %160 = vmatmul.mubr.f32.gmra.mrb[0].mxu0 %v60
  %v161 = vpop.f32.mrb[0].mxu0
  %v162 = vadd.f32 0.0, %v161
  %v163 = vpop.f32.mrb[0].mxu0
  %164 = vmatprep.mubr.f32.mxu0 0.0
  %165 = vmatmul.mubr.f32.gmra.mrb[0].mxu0 %v63
  %v166 = vpop.f32.mrb[0].mxu0
  %v167 = vadd.f32 0.0, %v166
  %v168 = vpop.f32.mrb[0].mxu0
  %169 = vmatprep.mubr.f32.mxu0 0.0
  %170 = vmatmul.mubr.f32.gmra.mrb[0].mxu0 %v66
  %v171 = vpop.f32.mrb[0].mxu0
  %v172 = vadd.f32 0.0, %v171
  %v173 = vpop.f32.mrb[0].mxu0
  %174 = vmatprep.mubr.f32.mxu0 0.0
  %175 = vmatmul.mubr.f32.gmra.mrb[0].mxu0 %v69
  %v176 = vpop.f32.mrb[0].mxu0
  %v177 = vadd.f32 0.0, %v176
  %v178 = vpop.f32.mrb[0].mxu0
  %179 = vdwg.mxu0
  %vm180 = vcmask 97280
  %v182 = vsel %vm180, %v27, 0
  %v185 = vsel %vm180, %v28, 0
  %v188 = vsel %vm180, %v29, 0
  %v191 = vsel %vm180, %v30, 0
  %v194 = vsel %vm180, %v31, 0
  %v197 = vsel %vm180, %v32, 0
  %v200 = vsel %vm180, %v33, 0
  %v203 = vsel %vm180, %v34, 0
  %v206 = vsel %vm71, %v36, 0
  %208 = vmatprep.subr.mxu0 0.0
  %209 = vmatpush1.msra.mxu0 %v35
  %210 = vmatprep.subr.mxu0 0.0
  %211 = vmatpush1.msra.mxu0 %v206
  %212 = vmatprep.subr.mxu0 0.0
  %213 = vmatpush1.msra.mxu0 0.0
  %214 = vmatprep.subr.mxu0 0.0
  %215 = vmatpush1.msra.mxu0 0.0
  %216 = vmatprep.subr.mxu0 0.0
  %217 = vmatpush1.msra.mxu0 0.0
  %218 = vmatprep.subr.mxu0 0.0
  %219 = vmatpush1.msra.mxu0 0.0
  %220 = vmatprep.subr.mxu0 0.0
  %221 = vmatpush1.msra.mxu0 0.0
  %222 = vmatprep.subr.mxu0 0.0
  %223 = vmatpush1.msra.mxu0 0.0
  %224 = vmatprep.subr.mxu0 0.0
  %225 = vmatpush1.msra.mxu0 0.0
  %226 = vmatprep.subr.mxu0 0.0
  %227 = vmatpush1.msra.mxu0 0.0
  %228 = vmatprep.subr.mxu0 0.0
  %229 = vmatpush1.msra.mxu0 0.0
  %230 = vmatprep.subr.mxu0 0.0
  %231 = vmatpush1.msra.mxu0 0.0
  %232 = vmatprep.subr.mxu0 0.0
  %233 = vmatpush1.msra.mxu0 0.0
  %234 = vmatprep.subr.mxu0 0.0
  %235 = vmatpush1.msra.mxu0 0.0
  %236 = vmatprep.subr.mxu0 0.0
  %237 = vmatpush1.msra.mxu0 0.0
  %238 = vmatprep.subr.mxu0 0.0
  %239 = vmatpush1.msra.mxu0 0.0
  %240 = vmatprep.subr.mxu0 0.0
  %241 = vmatpush1.msra.mxu0 0.0
  %242 = vmatprep.subr.mxu0 0.0
  %243 = vmatpush1.msra.mxu0 0.0
  %244 = vmatprep.subr.mxu0 0.0
  %245 = vmatpush1.msra.mxu0 0.0
  %246 = vmatprep.subr.mxu0 0.0
  %247 = vmatpush1.msra.mxu0 0.0
  %248 = vmatprep.subr.mxu0 0.0
  %249 = vmatpush1.msra.mxu0 0.0
  %250 = vmatprep.subr.mxu0 0.0
  %251 = vmatpush1.msra.mxu0 0.0
  %252 = vmatprep.subr.mxu0 0.0
  %253 = vmatpush1.msra.mxu0 0.0
  %254 = vmatprep.subr.mxu0 0.0
  %255 = vmatpush1.msra.mxu0 0.0
  %256 = vmatprep.subr.mxu0 0.0
  %257 = vmatpush1.msra.mxu0 0.0
  %258 = vmatprep.subr.mxu0 0.0
  %259 = vmatpush1.msra.mxu0 0.0
  %260 = vmatprep.subr.mxu0 0.0
  %261 = vmatpush1.msra.mxu0 0.0
  %262 = vmatprep.subr.mxu0 0.0
  %263 = vmatpush1.msra.mxu0 0.0
  %264 = vmatprep.subr.mxu0 0.0
  %265 = vmatpush1.msra.mxu0 0.0
  %266 = vmatprep.subr.mxu0 0.0
  %267 = vmatpush1.msra.mxu0 0.0
  %268 = vmatprep.subr.mxu0 0.0
  %269 = vmatpush1.msra.mxu0 0.0
  %270 = vmatprep.subr.mxu0 0.0
  %271 = vmatpush1.msra.mxu0 0.0
  %272 = vmatprep.mubr.f32.mxu0 0.0
  %273 = vmatmul.mubr.f32.gmra.mrb[0].mxu0 %v182
  %v274 = vpop.f32.mrb[0].mxu0
  %v275 = vadd.f32 %v142, %v274
  %v276 = vpop.f32.mrb[0].mxu0
  %277 = vmatprep.mubr.f32.mxu0 0.0
  %278 = vmatmul.mubr.f32.gmra.mrb[0].mxu0 %v185
  %v279 = vpop.f32.mrb[0].mxu0
  %v280 = vadd.f32 %v147, %v279
  %v281 = vpop.f32.mrb[0].mxu0
  %282 = vmatprep.mubr.f32.mxu0 0.0
  %283 = vmatmul.mubr.f32.gmra.mrb[0].mxu0 %v188
  %v284 = vpop.f32.mrb[0].mxu0
  %v285 = vadd.f32 %v152, %v284
  %v286 = vpop.f32.mrb[0].mxu0
  %287 = vmatprep.mubr.f32.mxu0 0.0
  %288 = vmatmul.mubr.f32.gmra.mrb[0].mxu0 %v191
  %v289 = vpop.f32.mrb[0].mxu0
  %v290 = vadd.f32 %v157, %v289
  %v291 = vpop.f32.mrb[0].mxu0
  %292 = vmatprep.mubr.f32.mxu0 0.0
  %293 = vmatmul.mubr.f32.gmra.mrb[0].mxu0 %v194
  %v294 = vpop.f32.mrb[0].mxu0
  %v295 = vadd.f32 %v162, %v294
  %v296 = vpop.f32.mrb[0].mxu0
  %297 = vmatprep.mubr.f32.mxu0 0.0
  %298 = vmatmul.mubr.f32.gmra.mrb[0].mxu0 %v197
  %v299 = vpop.f32.mrb[0].mxu0
  %v300 = vadd.f32 %v167, %v299
  %v301 = vpop.f32.mrb[0].mxu0
  %302 = vmatprep.mubr.f32.mxu0 0.0
  %303 = vmatmul.mubr.f32.gmra.mrb[0].mxu0 %v200
  %v304 = vpop.f32.mrb[0].mxu0
  %v305 = vadd.f32 %v172, %v304
  %v306 = vpop.f32.mrb[0].mxu0
  %307 = vmatprep.mubr.f32.mxu0 0.0
  %308 = vmatmul.mubr.f32.gmra.mrb[0].mxu0 %v203
  %v309 = vpop.f32.mrb[0].mxu0
  %v310 = vadd.f32 %v177, %v309
  %v311 = vpop.f32.mrb[0].mxu0
  %312 = vdwg.mxu0
  %vm313 = vcmask 261120
  %v314 = vsel %vm313, %v275, 0.0
  %v315 = vsel %vm313, %v280, 0.0
  %v316 = vadd.f32 %v314, %v315
  %v317 = vsel %vm313, %v285, 0.0
  %v318 = vadd.f32 %v316, %v317
  %v319 = vsel %vm313, %v290, 0.0
  %v320 = vadd.f32 %v318, %v319
  %v321 = vsel %vm313, %v295, 0.0
  %v322 = vadd.f32 %v320, %v321
  %v323 = vsel %vm313, %v300, 0.0
  %v324 = vadd.f32 %v322, %v323
  %v325 = vsel %vm313, %v305, 0.0
  %v326 = vadd.f32 %v324, %v325
  %v327 = vsel %vm313, %v310, 0.0
  %v328 = vadd.f32 %v326, %v327
  %v329 = vrot.slane %v328, 4
  %v330 = vadd.f32 %v328, %v329
  %v331 = vrot.slane %v330, 2
  %v332 = vadd.f32 %v330, %v331
  %v333 = vrot.slane %v332, 1
  %v334 = vadd.f32 %v332, %v333
  %v335 = vrcp.pop 64.0
  %v336 = vmul.f32 %v334, %v335
  %v337 = vsub.f32 %v275, %v336
  %v338 = vsub.f32 %v280, %v336
  %v339 = vsub.f32 %v285, %v336
  %v340 = vsub.f32 %v290, %v336
  %v341 = vsub.f32 %v295, %v336
  %v342 = vsub.f32 %v300, %v336
  %v343 = vsub.f32 %v305, %v336
  %v344 = vsub.f32 %v310, %v336
  %v345 = vmul.f32 %v337, %v337
  %v346 = vmul.f32 %v338, %v338
  %v347 = vmul.f32 %v339, %v339
  %v348 = vmul.f32 %v340, %v340
  %v349 = vmul.f32 %v341, %v341
  %v350 = vmul.f32 %v342, %v342
  %v351 = vmul.f32 %v343, %v343
  %v352 = vmul.f32 %v344, %v344
  %v353 = vsel %vm313, %v345, 0.0
  %v354 = vsel %vm313, %v346, 0.0
  %v355 = vadd.f32 %v353, %v354
  %v356 = vsel %vm313, %v347, 0.0
  %v357 = vadd.f32 %v355, %v356
  %v358 = vsel %vm313, %v348, 0.0
  %v359 = vadd.f32 %v357, %v358
  %v360 = vsel %vm313, %v349, 0.0
  %v361 = vadd.f32 %v359, %v360
  %v362 = vsel %vm313, %v350, 0.0
  %v363 = vadd.f32 %v361, %v362
  %v364 = vsel %vm313, %v351, 0.0
  %v365 = vadd.f32 %v363, %v364
  %v366 = vsel %vm313, %v352, 0.0
  %v367 = vadd.f32 %v365, %v366
  %v368 = vrot.slane %v367, 4
  %v369 = vadd.f32 %v367, %v368
  %v370 = vrot.slane %v369, 2
  %v371 = vadd.f32 %v369, %v370
  %v372 = vrot.slane %v371, 1
  %v373 = vadd.f32 %v371, %v372
  %v374 = vmul.f32 %v373, %v335
  %v375 = vadd.f32 %v374, 1e-05
  %v376 = vrsqrt.pop %v375
  %v377 = vmul.f32 %v26, %v376
  %v378 = vmul.f32 %v336, %v377
  %v380 = vrot.slane %v378, 7
  %v382 = vsub.f32 %v26, %v380
  %v383 = vlaneseq
  %v384 = vshrl.u32 %v383, 7
  %v385 = vsub.s32 0, %v384
  %v386 = vrot.slane %v377, %v385
  %v387 = vmul.f32 %v275, %v386
  %v388 = vmul.f32 %v280, %v386
  %v389 = vmul.f32 %v285, %v386
  %v390 = vmul.f32 %v290, %v386
  %v391 = vmul.f32 %v295, %v386
  %v392 = vmul.f32 %v300, %v386
  %v393 = vmul.f32 %v305, %v386
  %v394 = vmul.f32 %v310, %v386
  %v395 = vlaneseq
  %v396 = vshrl.u32 %v395, 7
  %v397 = vsub.s32 1, %v396
  %v398 = vrot.slane %v382, %v397
  %v399 = vadd.f32 %v387, %v398
  %v400 = vadd.f32 %v388, %v398
  %v401 = vadd.f32 %v389, %v398
  %v402 = vadd.f32 %v390, %v398
  %v403 = vadd.f32 %v391, %v398
  %v404 = vadd.f32 %v392, %v398
  %v405 = vadd.f32 %v393, %v398
  %v406 = vadd.f32 %v394, %v398
  %v407 = vmax.f32 %v399, 0.0
  %v408 = vmax.f32 %v400, 0.0
  %v409 = vmax.f32 %v401, 0.0
  %v410 = vmax.f32 %v402, 0.0
  %v411 = vmax.f32 %v403, 0.0
  %v412 = vmax.f32 %v404, 0.0
  %v413 = vmax.f32 %v405, 0.0
  %v414 = vmax.f32 %v406, 0.0
  %v415 = vld [vmem:[%s4] sm:$0xff]
  %v416 = vld [vmem:[%s4 + $0x8] sm:$0xff]
  %v417 = vld [vmem:[%s4 + $0x10] sm:$0xff]
  %v418 = vld [vmem:[%s4 + $0x18] sm:$0xff]
  %v420 = vsel %vm313, %v407, 0
  %v423 = vsel %vm313, %v408, 0
  %v426 = vsel %vm313, %v409, 0
  %v429 = vsel %vm313, %v410, 0
  %v432 = vsel %vm313, %v411, 0
  %v435 = vsel %vm313, %v412, 0
  %v438 = vsel %vm313, %v413, 0
  %v441 = vsel %vm313, %v414, 0
  %443 = vmatprep.subr.mxu0 0.0
  %444 = vmatpush1.msra.mxu0 %v415
  %445 = vmatprep.subr.mxu0 0.0
  %446 = vmatpush1.msra.mxu0 %v416
  %447 = vmatprep.subr.mxu0 0.0
  %448 = vmatpush1.msra.mxu0 %v417
  %449 = vmatprep.subr.mxu0 0.0
  %450 = vmatpush1.msra.mxu0 %v418
  %451 = vmatprep.subr.mxu0 0.0
  %452 = vmatpush1.msra.mxu0 0.0
  %453 = vmatprep.subr.mxu0 0.0
  %454 = vmatpush1.msra.mxu0 0.0
  %455 = vmatprep.subr.mxu0 0.0
  %456 = vmatpush1.msra.mxu0 0.0
  %457 = vmatprep.subr.mxu0 0.0
  %458 = vmatpush1.msra.mxu0 0.0
  %459 = vmatprep.subr.mxu0 0.0
  %460 = vmatpush1.msra.mxu0 0.0
  %461 = vmatprep.subr.mxu0 0.0
  %462 = vmatpush1.msra.mxu0 0.0
  %463 = vmatprep.subr.mxu0 0.0
  %464 = vmatpush1.msra.mxu0 0.0
  %465 = vmatprep.subr.mxu0 0.0
  %466 = vmatpush1.msra.mxu0 0.0
  %467 = vmatprep.subr.mxu0 0.0
  %468 = vmatpush1.msra.mxu0 0.0
  %469 = vmatprep.subr.mxu0 0.0
  %470 = vmatpush1.msra.mxu0 0.0
  %471 = vmatprep.subr.mxu0 0.0
  %472 = vmatpush1.msra.mxu0 0.0
  %473 = vmatprep.subr.mxu0 0.0
  %474 = vmatpush1.msra.mxu0 0.0
  %475 = vmatprep.subr.mxu0 0.0
  %476 = vmatpush1.msra.mxu0 0.0
  %477 = vmatprep.subr.mxu0 0.0
  %478 = vmatpush1.msra.mxu0 0.0
  %479 = vmatprep.subr.mxu0 0.0
  %480 = vmatpush1.msra.mxu0 0.0
  %481 = vmatprep.subr.mxu0 0.0
  %482 = vmatpush1.msra.mxu0 0.0
  %483 = vmatprep.subr.mxu0 0.0
  %484 = vmatpush1.msra.mxu0 0.0
  %485 = vmatprep.subr.mxu0 0.0
  %486 = vmatpush1.msra.mxu0 0.0
  %487 = vmatprep.subr.mxu0 0.0
  %488 = vmatpush1.msra.mxu0 0.0
  %489 = vmatprep.subr.mxu0 0.0
  %490 = vmatpush1.msra.mxu0 0.0
  %491 = vmatprep.subr.mxu0 0.0
  %492 = vmatpush1.msra.mxu0 0.0
  %493 = vmatprep.subr.mxu0 0.0
  %494 = vmatpush1.msra.mxu0 0.0
  %495 = vmatprep.subr.mxu0 0.0
  %496 = vmatpush1.msra.mxu0 0.0
  %497 = vmatprep.subr.mxu0 0.0
  %498 = vmatpush1.msra.mxu0 0.0
  %499 = vmatprep.subr.mxu0 0.0
  %500 = vmatpush1.msra.mxu0 0.0
  %501 = vmatprep.subr.mxu0 0.0
  %502 = vmatpush1.msra.mxu0 0.0
  %503 = vmatprep.subr.mxu0 0.0
  %504 = vmatpush1.msra.mxu0 0.0
  %505 = vmatprep.subr.mxu0 0.0
  %506 = vmatpush1.msra.mxu0 0.0
  %507 = vmatprep.mubr.f32.mxu0 0.0
  %508 = vmatmul.mubr.f32.gmra.mrb[0].mxu0 %v420
  %v509 = vpop.f32.mrb[0].mxu0
  %v510 = vadd.f32 0.0, %v509
  %v511 = vpop.f32.mrb[0].mxu0
  %512 = vmatprep.mubr.f32.mxu0 0.0
  %513 = vmatmul.mubr.f32.gmra.mrb[0].mxu0 %v423
  %v514 = vpop.f32.mrb[0].mxu0
  %v515 = vadd.f32 0.0, %v514
  %v516 = vpop.f32.mrb[0].mxu0
  %517 = vmatprep.mubr.f32.mxu0 0.0
  %518 = vmatmul.mubr.f32.gmra.mrb[0].mxu0 %v426
  %v519 = vpop.f32.mrb[0].mxu0
  %v520 = vadd.f32 0.0, %v519
  %v521 = vpop.f32.mrb[0].mxu0
  %522 = vmatprep.mubr.f32.mxu0 0.0
  %523 = vmatmul.mubr.f32.gmra.mrb[0].mxu0 %v429
  %v524 = vpop.f32.mrb[0].mxu0
  %v525 = vadd.f32 0.0, %v524
  %v526 = vpop.f32.mrb[0].mxu0
  %527 = vmatprep.mubr.f32.mxu0 0.0
  %528 = vmatmul.mubr.f32.gmra.mrb[0].mxu0 %v432
  %v529 = vpop.f32.mrb[0].mxu0
  %v530 = vadd.f32 0.0, %v529
  %v531 = vpop.f32.mrb[0].mxu0
  %532 = vmatprep.mubr.f32.mxu0 0.0
  %533 = vmatmul.mubr.f32.gmra.mrb[0].mxu0 %v435
  %v534 = vpop.f32.mrb[0].mxu0
  %v535 = vadd.f32 0.0, %v534
  %v536 = vpop.f32.mrb[0].mxu0
  %537 = vmatprep.mubr.f32.mxu0 0.0
  %538 = vmatmul.mubr.f32.gmra.mrb[0].mxu0 %v438
  %v539 = vpop.f32.mrb[0].mxu0
  %v540 = vadd.f32 0.0, %v539
  %v541 = vpop.f32.mrb[0].mxu0
  %542 = vmatprep.mubr.f32.mxu0 0.0
  %543 = vmatmul.mubr.f32.gmra.mrb[0].mxu0 %v441
  %v544 = vpop.f32.mrb[0].mxu0
  %v545 = vadd.f32 0.0, %v544
  %v546 = vpop.f32.mrb[0].mxu0
  %547 = vdwg.mxu0
  %v548 = vsel %vm313, %v510, 0.0
  %v549 = vsel %vm313, %v515, 0.0
  %v550 = vadd.f32 %v548, %v549
  %v551 = vsel %vm313, %v520, 0.0
  %v552 = vadd.f32 %v550, %v551
  %v553 = vsel %vm313, %v525, 0.0
  %v554 = vadd.f32 %v552, %v553
  %v555 = vsel %vm313, %v530, 0.0
  %v556 = vadd.f32 %v554, %v555
  %v557 = vsel %vm313, %v535, 0.0
  %v558 = vadd.f32 %v556, %v557
  %v559 = vsel %vm313, %v540, 0.0
  %v560 = vadd.f32 %v558, %v559
  %v561 = vsel %vm313, %v545, 0.0
  %v562 = vadd.f32 %v560, %v561
  %v563 = vrot.slane %v562, 4
  %v564 = vadd.f32 %v562, %v563
  %v565 = vrot.slane %v564, 2
  %v566 = vadd.f32 %v564, %v565
  %v567 = vrot.slane %v566, 1
  %v568 = vadd.f32 %v566, %v567
  %v569 = vmul.f32 %v568, %v335
  %v570 = vsub.f32 %v510, %v569
  %v571 = vsub.f32 %v515, %v569
  %v572 = vsub.f32 %v520, %v569
  %v573 = vsub.f32 %v525, %v569
  %v574 = vsub.f32 %v530, %v569
  %v575 = vsub.f32 %v535, %v569
  %v576 = vsub.f32 %v540, %v569
  %v577 = vsub.f32 %v545, %v569
  %v578 = vmul.f32 %v570, %v570
  %v579 = vmul.f32 %v571, %v571
  %v580 = vmul.f32 %v572, %v572
  %v581 = vmul.f32 %v573, %v573
  %v582 = vmul.f32 %v574, %v574
  %v583 = vmul.f32 %v575, %v575
  %v584 = vmul.f32 %v576, %v576
  %v585 = vmul.f32 %v577, %v577
  %v586 = vsel %vm313, %v578, 0.0
  %v587 = vsel %vm313, %v579, 0.0
  %v588 = vadd.f32 %v586, %v587
  %v589 = vsel %vm313, %v580, 0.0
  %v590 = vadd.f32 %v588, %v589
  %v591 = vsel %vm313, %v581, 0.0
  %v592 = vadd.f32 %v590, %v591
  %v593 = vsel %vm313, %v582, 0.0
  %v594 = vadd.f32 %v592, %v593
  %v595 = vsel %vm313, %v583, 0.0
  %v596 = vadd.f32 %v594, %v595
  %v597 = vsel %vm313, %v584, 0.0
  %v598 = vadd.f32 %v596, %v597
  %v599 = vsel %vm313, %v585, 0.0
  %v600 = vadd.f32 %v598, %v599
  %v601 = vrot.slane %v600, 4
  %v602 = vadd.f32 %v600, %v601
  %v603 = vrot.slane %v602, 2
  %v604 = vadd.f32 %v602, %v603
  %v605 = vrot.slane %v604, 1
  %v606 = vadd.f32 %v604, %v605
  %v607 = vmul.f32 %v606, %v335
  %v608 = vadd.f32 %v607, 1e-05
  %v609 = vrsqrt.pop %v608
  %v610 = vmul.f32 %v26, %v609
  %v611 = vmul.f32 %v569, %v610
  %v613 = vrot.slane %v611, 7
  %v615 = vsub.f32 %v26, %v613
  %v616 = vlaneseq
  %v617 = vshrl.u32 %v616, 7
  %v618 = vsub.s32 2, %v617
  %v619 = vrot.slane %v610, %v618
  %v620 = vmul.f32 %v510, %v619
  %v621 = vmul.f32 %v515, %v619
  %v622 = vmul.f32 %v520, %v619
  %v623 = vmul.f32 %v525, %v619
  %v624 = vmul.f32 %v530, %v619
  %v625 = vmul.f32 %v535, %v619
  %v626 = vmul.f32 %v540, %v619
  %v627 = vmul.f32 %v545, %v619
  %v628 = vlaneseq
  %v629 = vshrl.u32 %v628, 7
  %v630 = vsub.s32 3, %v629
  %v631 = vrot.slane %v615, %v630
  %v632 = vadd.f32 %v620, %v631
  %v633 = vadd.f32 %v621, %v631
  %v634 = vadd.f32 %v622, %v631
  %v635 = vadd.f32 %v623, %v631
  %v636 = vadd.f32 %v624, %v631
  %v637 = vadd.f32 %v625, %v631
  %v638 = vadd.f32 %v626, %v631
  %v639 = vadd.f32 %v627, %v631
  %v640 = vmax.f32 %v632, 0.0
  %v641 = vmax.f32 %v633, 0.0
  %v642 = vmax.f32 %v634, 0.0
  %v643 = vmax.f32 %v635, 0.0
  %v644 = vmax.f32 %v636, 0.0
  %v645 = vmax.f32 %v637, 0.0
  %v646 = vmax.f32 %v638, 0.0
  %v647 = vmax.f32 %v639, 0.0
  %v648 = vld [vmem:[%s5] sm:$0xff]
  %v649 = vld [vmem:[%s5 + $0x8] sm:$0xff]
  %v650 = vld [vmem:[%s5 + $0x10] sm:$0xff]
  %v651 = vld [vmem:[%s5 + $0x18] sm:$0xff]
  %v652 = vlaneseq
  %v653 = vshrl.u32 %v652, 7
  %v654 = vsub.s32 4, %v653
  %v655 = vrot.slane %v26, %v654
  %v657 = vsel %vm313, %v640, 0
  %v660 = vsel %vm313, %v641, 0
  %v663 = vsel %vm313, %v642, 0
  %v666 = vsel %vm313, %v643, 0
  %v669 = vsel %vm313, %v644, 0
  %v672 = vsel %vm313, %v645, 0
  %v675 = vsel %vm313, %v646, 0
  %v678 = vsel %vm313, %v647, 0
  %680 = vmatprep.subr.mxu0 0.0
  %681 = vmatpush1.msra.mxu0 %v648
  %682 = vmatprep.subr.mxu0 0.0
  %683 = vmatpush1.msra.mxu0 %v649
  %684 = vmatprep.subr.mxu0 0.0
  %685 = vmatpush1.msra.mxu0 %v650
  %686 = vmatprep.subr.mxu0 0.0
  %687 = vmatpush1.msra.mxu0 %v651
  %688 = vmatprep.subr.mxu0 0.0
  %689 = vmatpush1.msra.mxu0 0.0
  %690 = vmatprep.subr.mxu0 0.0
  %691 = vmatpush1.msra.mxu0 0.0
  %692 = vmatprep.subr.mxu0 0.0
  %693 = vmatpush1.msra.mxu0 0.0
  %694 = vmatprep.subr.mxu0 0.0
  %695 = vmatpush1.msra.mxu0 0.0
  %696 = vmatprep.subr.mxu0 0.0
  %697 = vmatpush1.msra.mxu0 0.0
  %698 = vmatprep.subr.mxu0 0.0
  %699 = vmatpush1.msra.mxu0 0.0
  %700 = vmatprep.subr.mxu0 0.0
  %701 = vmatpush1.msra.mxu0 0.0
  %702 = vmatprep.subr.mxu0 0.0
  %703 = vmatpush1.msra.mxu0 0.0
  %704 = vmatprep.subr.mxu0 0.0
  %705 = vmatpush1.msra.mxu0 0.0
  %706 = vmatprep.subr.mxu0 0.0
  %707 = vmatpush1.msra.mxu0 0.0
  %708 = vmatprep.subr.mxu0 0.0
  %709 = vmatpush1.msra.mxu0 0.0
  %710 = vmatprep.subr.mxu0 0.0
  %711 = vmatpush1.msra.mxu0 0.0
  %712 = vmatprep.subr.mxu0 0.0
  %713 = vmatpush1.msra.mxu0 0.0
  %714 = vmatprep.subr.mxu0 0.0
  %715 = vmatpush1.msra.mxu0 0.0
  %716 = vmatprep.subr.mxu0 0.0
  %717 = vmatpush1.msra.mxu0 0.0
  %718 = vmatprep.subr.mxu0 0.0
  %719 = vmatpush1.msra.mxu0 0.0
  %720 = vmatprep.subr.mxu0 0.0
  %721 = vmatpush1.msra.mxu0 0.0
  %722 = vmatprep.subr.mxu0 0.0
  %723 = vmatpush1.msra.mxu0 0.0
  %724 = vmatprep.subr.mxu0 0.0
  %725 = vmatpush1.msra.mxu0 0.0
  %726 = vmatprep.subr.mxu0 0.0
  %727 = vmatpush1.msra.mxu0 0.0
  %728 = vmatprep.subr.mxu0 0.0
  %729 = vmatpush1.msra.mxu0 0.0
  %730 = vmatprep.subr.mxu0 0.0
  %731 = vmatpush1.msra.mxu0 0.0
  %732 = vmatprep.subr.mxu0 0.0
  %733 = vmatpush1.msra.mxu0 0.0
  %734 = vmatprep.subr.mxu0 0.0
  %735 = vmatpush1.msra.mxu0 0.0
  %736 = vmatprep.subr.mxu0 0.0
  %737 = vmatpush1.msra.mxu0 0.0
  %738 = vmatprep.subr.mxu0 0.0
  %739 = vmatpush1.msra.mxu0 0.0
  %740 = vmatprep.subr.mxu0 0.0
  %741 = vmatpush1.msra.mxu0 0.0
  %742 = vmatprep.subr.mxu0 0.0
  %743 = vmatpush1.msra.mxu0 0.0
  %744 = vmatprep.mubr.f32.mxu0 0.0
  %745 = vmatmul.mubr.f32.gmra.mrb[0].mxu0 %v657
  %v746 = vpop.f32.mrb[0].mxu0
  %v747 = vadd.f32 %v655, %v746
  %v748 = vpop.f32.mrb[0].mxu0
  %749 = vmatprep.mubr.f32.mxu0 0.0
  %750 = vmatmul.mubr.f32.gmra.mrb[0].mxu0 %v660
  %v751 = vpop.f32.mrb[0].mxu0
  %v752 = vadd.f32 %v655, %v751
  %v753 = vpop.f32.mrb[0].mxu0
  %754 = vmatprep.mubr.f32.mxu0 0.0
  %755 = vmatmul.mubr.f32.gmra.mrb[0].mxu0 %v663
  %v756 = vpop.f32.mrb[0].mxu0
  %v757 = vadd.f32 %v655, %v756
  %v758 = vpop.f32.mrb[0].mxu0
  %759 = vmatprep.mubr.f32.mxu0 0.0
  %760 = vmatmul.mubr.f32.gmra.mrb[0].mxu0 %v666
  %v761 = vpop.f32.mrb[0].mxu0
  %v762 = vadd.f32 %v655, %v761
  %v763 = vpop.f32.mrb[0].mxu0
  %764 = vmatprep.mubr.f32.mxu0 0.0
  %765 = vmatmul.mubr.f32.gmra.mrb[0].mxu0 %v669
  %v766 = vpop.f32.mrb[0].mxu0
  %v767 = vadd.f32 %v655, %v766
  %v768 = vpop.f32.mrb[0].mxu0
  %769 = vmatprep.mubr.f32.mxu0 0.0
  %770 = vmatmul.mubr.f32.gmra.mrb[0].mxu0 %v672
  %v771 = vpop.f32.mrb[0].mxu0
  %v772 = vadd.f32 %v655, %v771
  %v773 = vpop.f32.mrb[0].mxu0
  %774 = vmatprep.mubr.f32.mxu0 0.0
  %775 = vmatmul.mubr.f32.gmra.mrb[0].mxu0 %v675
  %v776 = vpop.f32.mrb[0].mxu0
  %v777 = vadd.f32 %v655, %v776
  %v778 = vpop.f32.mrb[0].mxu0
  %779 = vmatprep.mubr.f32.mxu0 0.0
  %780 = vmatmul.mubr.f32.gmra.mrb[0].mxu0 %v678
  %v781 = vpop.f32.mrb[0].mxu0
  %v782 = vadd.f32 %v655, %v781
  %v783 = vpop.f32.mrb[0].mxu0
  %784 = vdwg.mxu0
  %vm785 = vcmask 64512
  %786 = vst.msk [vmem:[%s7] sm:$0xff] %vm785, %v747
  %787 = vst.msk [vmem:[%s7 + $0x8] sm:$0xff] %vm785, %v752
  %788 = vst.msk [vmem:[%s7 + $0x10] sm:$0xff] %vm785, %v757
  %789 = vst.msk [vmem:[%s7 + $0x18] sm:$0xff] %vm785, %v762
  %790 = vst.msk [vmem:[%s7 + $0x20] sm:$0xff] %vm785, %v767
  %791 = vst.msk [vmem:[%s7 + $0x28] sm:$0xff] %vm785, %v772
  %792 = vst.msk [vmem:[%s7 + $0x30] sm:$0xff] %vm785, %v777
  %793 = vst.msk [vmem:[%s7 + $0x38] sm:$0xff] %vm785, %v782
  // Predicated region
  $region30: #{tpu_custom_call.1} parent=0 // pred_check
    _
  $region31: #{tpu_custom_call.1} parent=0 // pred_check_branch
    %795 = sbr.rel (0) target = $region33
  $region32: #{tpu_custom_call.1} parent=0 // pred_region
    _
  $region33: #{tpu_custom_call.1} parent=0 // pred_fallthru
    _
  // Predicated region
  $region34: #{tpu_custom_call.1} parent=0 // pred_check
    _
  $region35: #{tpu_custom_call.1} parent=0 // pred_check_branch
    %797 = sbr.rel (0) target = $region37
  $region36: #{tpu_custom_call.1} parent=0 // pred_region
    _
  $region37: #{tpu_custom_call.1} parent=0 // pred_fallthru
    _

</llo_original>
